<compile_context>
chip_gen: v5e
topology: v5e:2x2
jax: 0.10.0
libtpu: 0.0.40
codegen_flags: <defaults>
</compile_context>

<pallas_src>
import functools

import jax
import jax.numpy as jnp
from jax.experimental import pallas as pl
from jax.experimental.pallas import tpu as pltpu


def _self_attn_kernel(nhead, tgt_ref, pos_ref, w_ref, vec_ref, out_ref):
    nb, L, E = tgt_ref.shape
    H = nhead
    hd = E // H
    G = H * nb                      # single leading batch dim for attention
    f32 = jnp.float32

    x3 = tgt_ref[...]                                   # (nb, L, E)
    xf = x3.reshape(nb * L, E)                          # sublane-tile regroup
    qk_in = (x3 + pos_ref[...]).reshape(nb * L, E)      # q = k = tgt + query_pos

    w = w_ref[...]                                      # (E, 4E) weight slab
    vecs = vec_ref[...]                                 # (6, E) bias/affine slab

    # ---- fused flat projections: two full-width MXU matmuls --------------
    qk = jnp.dot(qk_in, w[:, :2 * E], preferred_element_type=f32)   # (nb*L, 2E)
    v = jnp.dot(xf, w[:, 2 * E:3 * E], preferred_element_type=f32) + vecs[2:3]
    q = qk[:, :E] + vecs[0:1]                           # scale folded into Wq/bq
    k = qk[:, E:] + vecs[1:2]

    # ---- heads: lane dim -> one leading batch dim (H*nb, L, hd) -----------
    def to_heads(m):                                    # (nb*L, E) -> (G, L, hd)
        parts = [m[:, h * hd:(h + 1) * hd] for h in range(H)]
        return jnp.stack(parts, axis=0).reshape(G, L, hd)

    q_h, k_h, v_h = to_heads(q), to_heads(k), to_heads(v)

    # ---- attention core, batched over (head, batch) ------------------------
    s = jnp.einsum("gld,gmd->glm", q_h, k_h,
                   preferred_element_type=f32)          # (G, L, L)
    s = s - jnp.max(s, axis=-1, keepdims=True)
    p = jnp.exp(s)
    p = p / jnp.sum(p, axis=-1, keepdims=True)          # exact div: ref parity
    o_h = jnp.einsum("glm,gmd->gld", p, v_h,
                     preferred_element_type=f32)        # (G, L, hd)

    # ---- heads back to lanes, single K=E output projection -----------------
    o_heads = o_h.reshape(H, nb * L, hd)
    o_flat = jnp.concatenate([o_heads[h] for h in range(H)], axis=-1)   # (nb*L, E)
    attn = jnp.dot(o_flat, w[:, 3 * E:], preferred_element_type=f32) + vecs[3:4]

    # ---- residual (dropout = 0) + LayerNorm (eps = 1e-5) -------------------
    y = xf + attn
    mean = jnp.mean(y, axis=-1, keepdims=True)
    yc = y - mean
    var = jnp.mean(yc * yc, axis=-1, keepdims=True)
    out = yc * jax.lax.rsqrt(var + 1e-5) * vecs[4:5] + vecs[5:6]
    out_ref[...] = out.reshape(nb, L, E)


def pack_params(params, nhead):
    """One-time host-side repack of PyTorch-layout weights into the two slabs
    the kernel consumes.  Cache the result; do NOT call this per forward."""
    E = params["wq"].shape[0]
    hd = E // nhead
    scale = 1.0 / float(hd) ** 0.5
    # torch Linear: y = x @ W.T + b with W of shape (E_out, E_in); store W.T so
    # the kernel does plain x @ w.  1/sqrt(hd) folded into the Q projection.
    wslab = jnp.concatenate(
        [params["wq"].T * scale, params["wk"].T, params["wv"].T, params["wo"].T],
        axis=1).astype(jnp.float32)                          # (E, 4E)
    vecs = jnp.stack(
        [params["bq"] * scale, params["bk"], params["bv"],
         params["bo"], params["gamma"], params["beta"]],
        axis=0).astype(jnp.float32)                          # (6, E)
    return {"wslab": wslab, "vecs": vecs}


def _tensorcores_per_chip() -> int:
    # v7x = 2 TensorCores per chip; v5e / v6e = 1.  Splitting the batch-block
    # grid axis is only worth it when there is a second core to run it on.
    try:
        kind = jax.devices()[0].device_kind.lower()
    except Exception:
        return 1
    return 2 if ("v7" in kind or "7x" in kind) else 1


def self_attention_layer(tgt, query_pos, packed, nhead):
    """tgt, query_pos: (L, N, E) float32 (PyTorch MultiheadAttention layout)."""
    L, N, E = tgt.shape
    assert E % nhead == 0, "d_model must be divisible by nhead"

    # (L, N, E) -> (N, L, E): layout plumbing stays in the XLA wrapper.
    tgt_nle = jnp.transpose(tgt, (1, 0, 2))
    pos_nle = jnp.transpose(query_pos, (1, 0, 2))

    # Generation-aware batch blocking: grid=(1,) on single-TC chips (v5e/v6e),
    # grid=(2,) only when a second TensorCore exists (v7x) and N splits evenly.
    # At production L/E, cap nb so 2x(double-buffer) x 3 blocks x nb*L*E*4 B
    # plus the weight slabs fits v7x's 64 MiB VMEM (raise vmem_limit_bytes /
    # single-buffer the constant-index weight specs with pl.Buffered(1)).
    if _tensorcores_per_chip() >= 2 and N >= 2 and N % 2 == 0:
        nb = N // 2
    else:
        nb = N
    grid = (N // nb,)

    kernel = functools.partial(_self_attn_kernel, nhead)
    data_spec = pl.BlockSpec((nb, L, E), lambda b: (b, 0, 0))
    wslab, vecs = packed["wslab"], packed["vecs"]

    out_nle = pl.pallas_call(
        kernel,
        out_shape=jax.ShapeDtypeStruct((N, L, E), jnp.float32),
        grid=grid,
        in_specs=[
            data_spec,                                    # tgt
            data_spec,                                    # query_pos
            pl.BlockSpec(wslab.shape, lambda b: (0, 0)),  # packed weights
            pl.BlockSpec(vecs.shape, lambda b: (0, 0)),   # packed biases/affine
        ],
        out_specs=data_spec,
        compiler_params=pltpu.CompilerParams(
            dimension_semantics=("parallel",)),
    )(tgt_nle, pos_nle, wslab, vecs)

    return jnp.transpose(out_nle, (1, 0, 2))              # back to (L, N, E)


def _ref_forward(tgt, query_pos, params, nhead):
    """Pure-JAX reference mirroring PyTorch forward_post semantics."""
    L, N, E = tgt.shape
    hd = E // nhead
    qk = tgt + query_pos
    q = qk @ params["wq"].T + params["bq"]
    k = qk @ params["wk"].T + params["bk"]
    v = tgt @ params["wv"].T + params["bv"]

    def split(x):  # (L, N, E) -> (N, H, L, hd)
        return x.reshape(L, N, nhead, hd).transpose(1, 2, 0, 3)

    qh, kh, vh = split(q), split(k), split(v)
    s = jnp.einsum("nhld,nhmd->nhlm", qh, kh) / jnp.sqrt(hd)
    p = jax.nn.softmax(s, axis=-1)
    o = jnp.einsum("nhlm,nhmd->nhld", p, vh)
    o = o.transpose(2, 0, 1, 3).reshape(L, N, E)
    attn = o @ params["wo"].T + params["bo"]
    y = tgt + attn
    mean = y.mean(-1, keepdims=True)
    var = ((y - mean) ** 2).mean(-1, keepdims=True)
    return (y - mean) / jnp.sqrt(var + 1e-5) * params["gamma"] + params["beta"]


def _xavier_uniform(key, shape):
    fan_out, fan_in = shape
    bound = (6.0 / (fan_in + fan_out)) ** 0.5
    return jax.random.uniform(key, shape, jnp.float32, -bound, bound)


if __name__ == "__main__":
    # Small shapes: seq L=8, batch N=2, d_model E=32, nhead=4.
    L, N, E, H = 8, 2, 32, 4

    key = jax.random.PRNGKey(0)
    keys = jax.random.split(key, 8)

    # Deterministic params (xavier for matrices, zeros/ones otherwise, matching
    # the module's _reset_parameters / default inits).
    params = {
        "wq": _xavier_uniform(keys[0], (E, E)),
        "wk": _xavier_uniform(keys[1], (E, E)),
        "wv": _xavier_uniform(keys[2], (E, E)),
        "bq": jnp.zeros((E,), jnp.float32),
        "bk": jnp.zeros((E,), jnp.float32),
        "bv": jnp.zeros((E,), jnp.float32),
        "wo": _xavier_uniform(keys[3], (E, E)),
        "bo": jnp.zeros((E,), jnp.float32),
        "gamma": jnp.ones((E,), jnp.float32),
        "beta": jnp.zeros((E,), jnp.float32),
    }

    tgt = jax.random.normal(keys[4], (L, N, E), jnp.float32)
    query_pos = jax.random.normal(keys[5], (L, N, E), jnp.float32)

    packed = pack_params(params, H)            # hoisted out of the call path
    out = self_attention_layer(tgt, query_pos, packed, H)
    out = jax.block_until_ready(out)

    ref = _ref_forward(tgt, query_pos, params, H)
    assert out.shape == (L, N, E)
    # Exact softmax division + f32 MXU operands -> near-exact parity.
    assert jnp.allclose(out, ref, atol=1e-4, rtol=1e-4), "mismatch vs reference"

    print("KERNEL_OK")
</pallas_src>

<mosaic_0001>
module attributes {stable_mosaic.version = 11 : i64} {
  func.func @_self_attn_kernel(%arg0: i32, %arg1: memref<2x8x32xf32, #tpu.memory_space<vmem>>, %arg2: memref<2x8x32xf32, #tpu.memory_space<vmem>>, %arg3: memref<32x128xf32, #tpu.memory_space<vmem>>, %arg4: memref<6x32xf32, #tpu.memory_space<vmem>>, %arg5: memref<2x8x32xf32, #tpu.memory_space<vmem>>) attributes {dimension_semantics = [#tpu.dimension_semantics<parallel>], iteration_bounds = array<i64: 1>, scalar_prefetch = 0 : i64, scratch_operands = 0 : i64, tpu.core_type = #tpu.core_type<tc>, window_params = [{transform_indices = @transform_0, window_bounds = array<i64: 2, 8, 32>}, {transform_indices = @transform_1, window_bounds = array<i64: 2, 8, 32>}, {pipeline_mode = #tpu.pipeline_mode<synchronous>, transform_indices = @transform_2, window_bounds = array<i64: 32, 128>}, {pipeline_mode = #tpu.pipeline_mode<synchronous>, transform_indices = @transform_3, window_bounds = array<i64: 6, 32>}, {transform_indices = @transform_4, window_bounds = array<i64: 2, 8, 32>}]} {
    %c0 = arith.constant 0 : index
    %c0_0 = arith.constant 0 : index
    %c0_1 = arith.constant 0 : index
    %0 = vector.load %arg1[%c0, %c0_0, %c0_1] : memref<2x8x32xf32, #tpu.memory_space<vmem>>, vector<2x8x32xf32>
    %1 = vector.shape_cast %0 : vector<2x8x32xf32> to vector<16x32xf32>
    %c0_2 = arith.constant 0 : index
    %c0_3 = arith.constant 0 : index
    %c0_4 = arith.constant 0 : index
    %2 = vector.load %arg2[%c0_2, %c0_3, %c0_4] : memref<2x8x32xf32, #tpu.memory_space<vmem>>, vector<2x8x32xf32>
    %3 = arith.addf %0, %2 : vector<2x8x32xf32>
    %4 = vector.shape_cast %3 : vector<2x8x32xf32> to vector<16x32xf32>
    %c0_5 = arith.constant 0 : index
    %c0_6 = arith.constant 0 : index
    %5 = vector.load %arg3[%c0_5, %c0_6] : memref<32x128xf32, #tpu.memory_space<vmem>>, vector<32x128xf32>
    %c0_7 = arith.constant 0 : index
    %c0_8 = arith.constant 0 : index
    %6 = vector.load %arg4[%c0_7, %c0_8] : memref<6x32xf32, #tpu.memory_space<vmem>>, vector<6x32xf32>
    %7 = vector.extract_strided_slice %5 {offsets = [0, 0], sizes = [32, 64], strides = [1, 1]} : vector<32x128xf32> to vector<32x64xf32>
    %cst = arith.constant dense<0.000000e+00> : vector<16x64xf32>
    %8 = tpu.matmul %4, %7, %cst {dimension_numbers = #tpu.dot_dimension_numbers<[1], [0], [0], [1], [0, 0, 1, 1], [], []>} : vector<16x32xf32>, vector<32x64xf32>, vector<16x64xf32> -> vector<16x64xf32>
    %9 = vector.extract_strided_slice %5 {offsets = [0, 64], sizes = [32, 32], strides = [1, 1]} : vector<32x128xf32> to vector<32x32xf32>
    %cst_9 = arith.constant dense<0.000000e+00> : vector<16x32xf32>
    %10 = tpu.matmul %1, %9, %cst_9 {dimension_numbers = #tpu.dot_dimension_numbers<[1], [0], [0], [1], [0, 0, 1, 1], [], []>} : vector<16x32xf32>, vector<32x32xf32>, vector<16x32xf32> -> vector<16x32xf32>
    %11 = vector.extract_strided_slice %6 {offsets = [2, 0], sizes = [1, 32], strides = [1, 1]} : vector<6x32xf32> to vector<1x32xf32>
    %12 = vector.broadcast %11 : vector<1x32xf32> to vector<16x32xf32>
    %13 = arith.addf %10, %12 : vector<16x32xf32>
    %14 = vector.extract_strided_slice %8 {offsets = [0, 0], sizes = [16, 32], strides = [1, 1]} : vector<16x64xf32> to vector<16x32xf32>
    %15 = vector.extract_strided_slice %6 {offsets = [0, 0], sizes = [1, 32], strides = [1, 1]} : vector<6x32xf32> to vector<1x32xf32>
    %16 = vector.broadcast %15 : vector<1x32xf32> to vector<16x32xf32>
    %17 = arith.addf %14, %16 : vector<16x32xf32>
    %18 = vector.extract_strided_slice %8 {offsets = [0, 32], sizes = [16, 32], strides = [1, 1]} : vector<16x64xf32> to vector<16x32xf32>
    %19 = vector.extract_strided_slice %6 {offsets = [1, 0], sizes = [1, 32], strides = [1, 1]} : vector<6x32xf32> to vector<1x32xf32>
    %20 = vector.broadcast %19 : vector<1x32xf32> to vector<16x32xf32>
    %21 = arith.addf %18, %20 : vector<16x32xf32>
    %22 = vector.extract_strided_slice %17 {offsets = [0, 0], sizes = [16, 8], strides = [1, 1]} : vector<16x32xf32> to vector<16x8xf32>
    %23 = vector.extract_strided_slice %17 {offsets = [0, 8], sizes = [16, 8], strides = [1, 1]} : vector<16x32xf32> to vector<16x8xf32>
    %24 = vector.extract_strided_slice %17 {offsets = [0, 16], sizes = [16, 8], strides = [1, 1]} : vector<16x32xf32> to vector<16x8xf32>
    %25 = vector.extract_strided_slice %17 {offsets = [0, 24], sizes = [16, 8], strides = [1, 1]} : vector<16x32xf32> to vector<16x8xf32>
    %26 = vector.shape_cast %22 : vector<16x8xf32> to vector<1x16x8xf32>
    %27 = vector.shape_cast %23 : vector<16x8xf32> to vector<1x16x8xf32>
    %28 = vector.shape_cast %24 : vector<16x8xf32> to vector<1x16x8xf32>
    %29 = vector.shape_cast %25 : vector<16x8xf32> to vector<1x16x8xf32>
    %30 = tpu.concatenate %26, %27, %28, %29 in 0 : vector<1x16x8xf32>, vector<1x16x8xf32>, vector<1x16x8xf32>, vector<1x16x8xf32> -> vector<4x16x8xf32>
    %31 = vector.shape_cast %30 : vector<4x16x8xf32> to vector<8x8x8xf32>
    %32 = vector.extract_strided_slice %21 {offsets = [0, 0], sizes = [16, 8], strides = [1, 1]} : vector<16x32xf32> to vector<16x8xf32>
    %33 = vector.extract_strided_slice %21 {offsets = [0, 8], sizes = [16, 8], strides = [1, 1]} : vector<16x32xf32> to vector<16x8xf32>
    %34 = vector.extract_strided_slice %21 {offsets = [0, 16], sizes = [16, 8], strides = [1, 1]} : vector<16x32xf32> to vector<16x8xf32>
    %35 = vector.extract_strided_slice %21 {offsets = [0, 24], sizes = [16, 8], strides = [1, 1]} : vector<16x32xf32> to vector<16x8xf32>
    %36 = vector.shape_cast %32 : vector<16x8xf32> to vector<1x16x8xf32>
    %37 = vector.shape_cast %33 : vector<16x8xf32> to vector<1x16x8xf32>
    %38 = vector.shape_cast %34 : vector<16x8xf32> to vector<1x16x8xf32>
    %39 = vector.shape_cast %35 : vector<16x8xf32> to vector<1x16x8xf32>
    %40 = tpu.concatenate %36, %37, %38, %39 in 0 : vector<1x16x8xf32>, vector<1x16x8xf32>, vector<1x16x8xf32>, vector<1x16x8xf32> -> vector<4x16x8xf32>
    %41 = vector.shape_cast %40 : vector<4x16x8xf32> to vector<8x8x8xf32>
    %42 = vector.extract_strided_slice %13 {offsets = [0, 0], sizes = [16, 8], strides = [1, 1]} : vector<16x32xf32> to vector<16x8xf32>
    %43 = vector.extract_strided_slice %13 {offsets = [0, 8], sizes = [16, 8], strides = [1, 1]} : vector<16x32xf32> to vector<16x8xf32>
    %44 = vector.extract_strided_slice %13 {offsets = [0, 16], sizes = [16, 8], strides = [1, 1]} : vector<16x32xf32> to vector<16x8xf32>
    %45 = vector.extract_strided_slice %13 {offsets = [0, 24], sizes = [16, 8], strides = [1, 1]} : vector<16x32xf32> to vector<16x8xf32>
    %46 = vector.shape_cast %42 : vector<16x8xf32> to vector<1x16x8xf32>
    %47 = vector.shape_cast %43 : vector<16x8xf32> to vector<1x16x8xf32>
    %48 = vector.shape_cast %44 : vector<16x8xf32> to vector<1x16x8xf32>
    %49 = vector.shape_cast %45 : vector<16x8xf32> to vector<1x16x8xf32>
    %50 = tpu.concatenate %46, %47, %48, %49 in 0 : vector<1x16x8xf32>, vector<1x16x8xf32>, vector<1x16x8xf32>, vector<1x16x8xf32> -> vector<4x16x8xf32>
    %51 = vector.shape_cast %50 : vector<4x16x8xf32> to vector<8x8x8xf32>
    "tpu.trace_start"() <{level = 10 : i32, message = "gld,gmd->glm"}> : () -> ()
    %cst_10 = arith.constant dense<0.000000e+00> : vector<8x8x8xf32>
    %52 = tpu.matmul %31, %41, %cst_10 {dimension_numbers = #tpu.dot_dimension_numbers<[2], [2], [1], [1], [0, 0, 0, 1, 1, 1], [0], [0]>} : vector<8x8x8xf32>, vector<8x8x8xf32>, vector<8x8x8xf32> -> vector<8x8x8xf32>
    "tpu.trace_stop"() : () -> ()
    %cst_11 = arith.constant dense<0xFF800000> : vector<8x8xf32>
    %53 = vector.multi_reduction <maximumf>, %52, %cst_11 [2] : vector<8x8x8xf32> to vector<8x8xf32>
    %54 = vector.shape_cast %53 : vector<8x8xf32> to vector<8x8x1xf32>
    %55 = vector.broadcast %54 : vector<8x8x1xf32> to vector<8x8x8xf32>
    %56 = arith.subf %52, %55 : vector<8x8x8xf32>
    %57 = math.exp %56 : vector<8x8x8xf32>
    %cst_12 = arith.constant dense<0.000000e+00> : vector<8x8xf32>
    %58 = vector.multi_reduction <add>, %57, %cst_12 [2] : vector<8x8x8xf32> to vector<8x8xf32>
    %59 = vector.shape_cast %58 : vector<8x8xf32> to vector<8x8x1xf32>
    %60 = vector.broadcast %59 : vector<8x8x1xf32> to vector<8x8x8xf32>
    %61 = arith.divf %57, %60 : vector<8x8x8xf32>
    "tpu.trace_start"() <{level = 10 : i32, message = "glm,gmd->gld"}> : () -> ()
    %cst_13 = arith.constant dense<0.000000e+00> : vector<8x8x8xf32>
    %62 = tpu.matmul %61, %51, %cst_13 {dimension_numbers = #tpu.dot_dimension_numbers<[2], [1], [1], [2], [0, 0, 0, 1, 1, 2], [0], [0]>} : vector<8x8x8xf32>, vector<8x8x8xf32>, vector<8x8x8xf32> -> vector<8x8x8xf32>
    "tpu.trace_stop"() : () -> ()
    %63 = vector.shape_cast %62 : vector<8x8x8xf32> to vector<4x16x8xf32>
    %64 = vector.extract_strided_slice %63 {offsets = [0, 0, 0], sizes = [1, 16, 8], strides = [1, 1, 1]} : vector<4x16x8xf32> to vector<1x16x8xf32>
    %65 = vector.shape_cast %64 : vector<1x16x8xf32> to vector<16x8xf32>
    %66 = vector.extract_strided_slice %63 {offsets = [1, 0, 0], sizes = [1, 16, 8], strides = [1, 1, 1]} : vector<4x16x8xf32> to vector<1x16x8xf32>
    %67 = vector.shape_cast %66 : vector<1x16x8xf32> to vector<16x8xf32>
    %68 = vector.extract_strided_slice %63 {offsets = [2, 0, 0], sizes = [1, 16, 8], strides = [1, 1, 1]} : vector<4x16x8xf32> to vector<1x16x8xf32>
    %69 = vector.shape_cast %68 : vector<1x16x8xf32> to vector<16x8xf32>
    %70 = vector.extract_strided_slice %63 {offsets = [3, 0, 0], sizes = [1, 16, 8], strides = [1, 1, 1]} : vector<4x16x8xf32> to vector<1x16x8xf32>
    %71 = vector.shape_cast %70 : vector<1x16x8xf32> to vector<16x8xf32>
    %72 = tpu.concatenate %65, %67, %69, %71 in 1 : vector<16x8xf32>, vector<16x8xf32>, vector<16x8xf32>, vector<16x8xf32> -> vector<16x32xf32>
    %73 = vector.extract_strided_slice %5 {offsets = [0, 96], sizes = [32, 32], strides = [1, 1]} : vector<32x128xf32> to vector<32x32xf32>
    %cst_14 = arith.constant dense<0.000000e+00> : vector<16x32xf32>
    %74 = tpu.matmul %72, %73, %cst_14 {dimension_numbers = #tpu.dot_dimension_numbers<[1], [0], [0], [1], [0, 0, 1, 1], [], []>} : vector<16x32xf32>, vector<32x32xf32>, vector<16x32xf32> -> vector<16x32xf32>
    %75 = vector.extract_strided_slice %6 {offsets = [3, 0], sizes = [1, 32], strides = [1, 1]} : vector<6x32xf32> to vector<1x32xf32>
    %76 = vector.broadcast %75 : vector<1x32xf32> to vector<16x32xf32>
    %77 = arith.addf %74, %76 : vector<16x32xf32>
    %78 = arith.addf %1, %77 : vector<16x32xf32>
    %cst_15 = arith.constant dense<0.000000e+00> : vector<16xf32>
    %79 = vector.multi_reduction <add>, %78, %cst_15 [1] : vector<16x32xf32> to vector<16xf32>
    %80 = vector.shape_cast %79 : vector<16xf32> to vector<16x1xf32>
    %cst_16 = arith.constant 3.200000e+01 : f32
    %81 = vector.broadcast %cst_16 : f32 to vector<16x1xf32>
    %82 = arith.divf %80, %81 : vector<16x1xf32>
    %83 = vector.broadcast %82 : vector<16x1xf32> to vector<16x32xf32>
    %84 = arith.subf %78, %83 : vector<16x32xf32>
    %85 = arith.mulf %84, %84 : vector<16x32xf32>
    %cst_17 = arith.constant dense<0.000000e+00> : vector<16xf32>
    %86 = vector.multi_reduction <add>, %85, %cst_17 [1] : vector<16x32xf32> to vector<16xf32>
    %87 = vector.shape_cast %86 : vector<16xf32> to vector<16x1xf32>
    %cst_18 = arith.constant 3.200000e+01 : f32
    %88 = vector.broadcast %cst_18 : f32 to vector<16x1xf32>
    %89 = arith.divf %87, %88 : vector<16x1xf32>
    %cst_19 = arith.constant 9.99999974E-6 : f32
    %90 = vector.broadcast %cst_19 : f32 to vector<16x1xf32>
    %91 = arith.addf %89, %90 : vector<16x1xf32>
    %92 = math.rsqrt %91 : vector<16x1xf32>
    %93 = vector.broadcast %92 : vector<16x1xf32> to vector<16x32xf32>
    %94 = arith.mulf %84, %93 : vector<16x32xf32>
    %95 = vector.extract_strided_slice %6 {offsets = [4, 0], sizes = [1, 32], strides = [1, 1]} : vector<6x32xf32> to vector<1x32xf32>
    %96 = vector.broadcast %95 : vector<1x32xf32> to vector<16x32xf32>
    %97 = arith.mulf %94, %96 : vector<16x32xf32>
    %98 = vector.extract_strided_slice %6 {offsets = [5, 0], sizes = [1, 32], strides = [1, 1]} : vector<6x32xf32> to vector<1x32xf32>
    %99 = vector.broadcast %98 : vector<1x32xf32> to vector<16x32xf32>
    %100 = arith.addf %97, %99 : vector<16x32xf32>
    %101 = vector.shape_cast %100 : vector<16x32xf32> to vector<2x8x32xf32>
    %c0_20 = arith.constant 0 : index
    %c0_21 = arith.constant 0 : index
    %c0_22 = arith.constant 0 : index
    %102 = vector.load %arg5[%c0_20, %c0_21, %c0_22] : memref<2x8x32xf32, #tpu.memory_space<vmem>>, vector<2x8x32xf32>
    tpu.vector_store %arg5[%c0_20, %c0_21, %c0_22], %101 {strides = array<i32>} : memref<2x8x32xf32, #tpu.memory_space<vmem>>, vector<2x8x32xf32>,
    return
  }
  func.func @transform_0(%arg0: i32) -> (i32, i32, i32) {
    %c0_i32 = arith.constant 0 : i32
    %c0_i32_0 = arith.constant 0 : i32
    %c0_i32_1 = arith.constant 0 : i32
    return %arg0, %c0_i32, %c0_i32_0 : i32, i32, i32
  }
  func.func @transform_1(%arg0: i32) -> (i32, i32, i32) {
    %c0_i32 = arith.constant 0 : i32
    %c0_i32_0 = arith.constant 0 : i32
    %c0_i32_1 = arith.constant 0 : i32
    return %arg0, %c0_i32, %c0_i32_0 : i32, i32, i32
  }
  func.func @transform_2(%arg0: i32) -> (i32, i32) {
    %c0_i32 = arith.constant 0 : i32
    %c0_i32_0 = arith.constant 0 : i32
    %c0_i32_1 = arith.constant 0 : i32
    return %c0_i32, %c0_i32_0 : i32, i32
  }
  func.func @transform_3(%arg0: i32) -> (i32, i32) {
    %c0_i32 = arith.constant 0 : i32
    %c0_i32_0 = arith.constant 0 : i32
    %c0_i32_1 = arith.constant 0 : i32
    return %c0_i32, %c0_i32_0 : i32, i32
  }
  func.func @transform_4(%arg0: i32) -> (i32, i32, i32) {
    %c0_i32 = arith.constant 0 : i32
    %c0_i32_0 = arith.constant 0 : i32
    %c0_i32_1 = arith.constant 0 : i32
    return %arg0, %c0_i32, %c0_i32_0 : i32, i32, i32
  }
}

</mosaic_0001>

<llo_original>
// kernel: tpu_custom_call.1
$region0: #{tpu_custom_call.1}
  #allocation0 [shape = 'u32[]', space=smem, size = 0x4, offset = 0x4, fixed_abs, tag = 'smem constant byte address 0x4 - core index']
  #allocation1 [shape = 'u32[72,128]{1,0:T(1,128)}', space=vmem, size = 0x9000, scoped, tag = 'internal scratch']
  %s0 = inlined_call_operand.hbm [shape: f32[2,8,32], index: 0, kind: input, shape index: {}]
  %s1 = inlined_call_operand.hbm [shape: f32[2,8,32], index: 1, kind: input, shape index: {}]
  %s2 = inlined_call_operand.hbm [shape: f32[32,128], index: 2, kind: input, shape index: {}]
  %s3 = inlined_call_operand.hbm [shape: f32[6,32], index: 3, kind: input, shape index: {}]
  %s4 = inlined_call_operand.hbm [shape: f32[2,8,32], index: 4, kind: output, shape index: {}]
  %s5 = sld [smem:[#allocation0]]
  $region42: #{tpu_custom_call.1} parent=0
    _
  %s7 = ssub.s32 1, %s5
  %s8 = scalar_select 0, %s7, %s5
  $region1: #{tpu_custom_call.1} parent=0
    #allocation2 [shape = 'u8[8192]{0}', space=vmem, size = 0x2000, scoped, tag = 'input window, operand 0, single buffered']
    #allocation3 [shape = 's32[1]{0}', space=sflag, size = 0x4, scoped, tag = 'scoped memory for tpu_custom_call.1']
    #allocation4 [shape = 's32[1]{0}', space=sflag, size = 0x4, scoped, tag = 'scoped memory for tpu_custom_call.1']
    #allocation5 [shape = 'u8[8192]{0}', space=vmem, size = 0x2000, scoped, tag = 'input window, operand 1, single buffered']
    #allocation6 [shape = 's32[1]{0}', space=sflag, size = 0x4, scoped, tag = 'scoped memory for tpu_custom_call.1']
    #allocation7 [shape = 'u8[16384]{0}', space=vmem, size = 0x4000, scoped, tag = 'input window, operand 2, single buffered']
    #allocation8 [shape = 'u8[4096]{0}', space=vmem, size = 0x1000, scoped, tag = 'input window, operand 3, single buffered']
    #allocation9 [shape = 's32[1]{0}', space=sflag, size = 0x4, scoped, tag = 'scoped memory for tpu_custom_call.1']
    #allocation10 [shape = 'u8[8192]{0}', space=vmem, size = 0x2000, scoped, tag = 'output window, operand 0, single buffered']
    %9 = vsyncpa [#allocation3], 0
    %10 = vsyncpa [#allocation6], 0
    %11 = vsyncpa [#allocation9], 0
    %12 = vsyncpa [#allocation4], 0
    // Predicated region
    $region2: #{tpu_custom_call.1} parent=1 // pred_check
      _
    $region3: #{tpu_custom_call.1} parent=1 // pred_check_branch
      %14 = sbr.rel (0) target = $region5
    $region4: #{tpu_custom_call.1} parent=1 // pred_region
      %16 = vsyncadd [#allocation3], 0
      %s17 = sshll.u32 %s0, 4
      %s18 = int_to_ptr.hbm [resolvable:$true] %s17
      %s19 = sshll.u32 [#allocation2], 4
      %s20 = int_to_ptr.vmem [resolvable:$true] %s19
      %25 = dma.hbm_to_vmem [thread:$0]  %s18, 256, %s20, [#allocation3], 128, 128, 8
    $region5: #{tpu_custom_call.1} parent=1 // pred_fallthru
      _
    // Predicated region
    $region6: #{tpu_custom_call.1} parent=1 // pred_check
      _
    $region7: #{tpu_custom_call.1} parent=1 // pred_check_branch
      %27 = sbr.rel (0) target = $region9
    $region8: #{tpu_custom_call.1} parent=1 // pred_region
      %29 = vsyncadd [#allocation6], 0
      %s30 = sshll.u32 %s1, 4
      %s31 = int_to_ptr.hbm [resolvable:$true] %s30
      %s32 = sshll.u32 [#allocation5], 4
      %s33 = int_to_ptr.vmem [resolvable:$true] %s32
      %38 = dma.hbm_to_vmem [thread:$0]  %s31, 256, %s33, [#allocation6], 128, 128, 8
    $region9: #{tpu_custom_call.1} parent=1 // pred_fallthru
      _
    // Predicated region
    $region10: #{tpu_custom_call.1} parent=1 // pred_check
      _
    $region11: #{tpu_custom_call.1} parent=1 // pred_check_branch
      %40 = sbr.rel (0) target = $region13
    $region12: #{tpu_custom_call.1} parent=1 // pred_region
      %42 = vsyncadd [#allocation6], 0
      %s43 = sshll.u32 %s2, 4
      %s44 = int_to_ptr.hbm [resolvable:$true] %s43
      %s45 = sshll.u32 [#allocation7], 4
      %s46 = int_to_ptr.vmem [resolvable:$true] %s45
      %51 = dma.hbm_to_vmem [thread:$0]  %s44, 512, %s46, [#allocation6], 128, 128, 8
    $region13: #{tpu_custom_call.1} parent=1 // pred_fallthru
      _
    // Predicated region
    $region14: #{tpu_custom_call.1} parent=1 // pred_check
      _
    $region15: #{tpu_custom_call.1} parent=1 // pred_check_branch
      %53 = sbr.rel (0) target = $region17
    $region16: #{tpu_custom_call.1} parent=1 // pred_region
      %55 = vsyncadd [#allocation9], 0
      %s57 = sshll.u32 %s3, 4
      %s58 = int_to_ptr.hbm [resolvable:$true] %s57
      %s59 = sshll.u32 [#allocation8], 4
      %s60 = int_to_ptr.vmem [resolvable:$true] %s59
      %62 = dma.hbm_to_vmem [thread:$0]  %s58, 128, %s60, [#allocation9]
    $region17: #{tpu_custom_call.1} parent=1 // pred_fallthru
      _
    // Predicated region
    $region18: #{tpu_custom_call.1} parent=1 // pred_check
      _
    $region19: #{tpu_custom_call.1} parent=1 // pred_check_branch
      %64 = sbr.rel (0) target = $region21
    $region20: #{tpu_custom_call.1} parent=1 // pred_region
      %66 = dma.done [#allocation3], 256
    $region21: #{tpu_custom_call.1} parent=1 // pred_fallthru
      _
    // Predicated region
    $region22: #{tpu_custom_call.1} parent=1 // pred_check
      _
    $region23: #{tpu_custom_call.1} parent=1 // pred_check_branch
      %68 = sbr.rel (0) target = $region25
    $region24: #{tpu_custom_call.1} parent=1 // pred_region
      %70 = dma.done [#allocation6], 256
    $region25: #{tpu_custom_call.1} parent=1 // pred_fallthru
      _
    // Predicated region
    $region26: #{tpu_custom_call.1} parent=1 // pred_check
      _
    $region27: #{tpu_custom_call.1} parent=1 // pred_check_branch
      %72 = sbr.rel (0) target = $region29
    $region28: #{tpu_custom_call.1} parent=1 // pred_region
      %74 = dma.done [#allocation6], 512
    $region29: #{tpu_custom_call.1} parent=1 // pred_fallthru
      _
    // Predicated region
    $region30: #{tpu_custom_call.1} parent=1 // pred_check
      _
    $region31: #{tpu_custom_call.1} parent=1 // pred_check_branch
      %76 = sbr.rel (0) target = $region33
    $region32: #{tpu_custom_call.1} parent=1 // pred_region
      %78 = dma.done [#allocation9], 128
    $region33: #{tpu_custom_call.1} parent=1 // pred_fallthru
      _
    %v79 = vld [vmem:[#allocation2] sm:$0xff]
    %v80 = vld [vmem:[#allocation2 + $0x8] sm:$0xff]
    %v81 = vld [vmem:[#allocation5] sm:$0xff]
    %v82 = vld [vmem:[#allocation5 + $0x8] sm:$0xff]
    %v83 = vadd.f32 %v79, %v81
    %v84 = vadd.f32 %v80, %v82
    %v85 = vld [vmem:[#allocation7] sm:$0xff]
    %v86 = vld [vmem:[#allocation7 + $0x8] sm:$0xff]
    %v87 = vld [vmem:[#allocation7 + $0x10] sm:$0xff]
    %v88 = vld [vmem:[#allocation7 + $0x18] sm:$0xff]
    %v89 = vld [vmem:[#allocation8] sm:$0x3f]
    %vm90 = vcmask 261120
    %v92 = vsel %vm90, %v83, 0
    %v95 = vsel %vm90, %v84, 0
    %97 = vmatpush.msra.mxu0 0.0
    %98 = vmatpush.msra.mxu0 0.0
    %99 = vmatpush.msra.mxu0 0.0
    %100 = vmatpush.msra.mxu0 0.0
    %101 = vmatpush.msra.mxu0 0.0
    %102 = vmatpush.msra.mxu0 0.0
    %103 = vmatpush.msra.mxu0 0.0
    %104 = vmatpush.msra.mxu0 0.0
    %105 = vmatpush.msra.mxu0 0.0
    %106 = vmatpush.msra.mxu0 0.0
    %107 = vmatpush.msra.mxu0 0.0
    %108 = vmatpush.msra.mxu0 0.0
    %109 = vmatpush.msra.mxu0 %v88
    %110 = vmatpush.msra.mxu0 %v87
    %111 = vmatpush.msra.mxu0 %v86
    %112 = vmatpush.msra.mxu0 %v85
    %113 = vmatmul.f32.gmra.mxu0 %v92
    %v114 = vpop.f32.mrf.mxu0
    %v115 = vadd.f32 0.0, %v114
    %116 = vmatmul.f32.gmra.mxu0 %v95
    %v117 = vpop.f32.mrf.mxu0
    %v118 = vadd.f32 0.0, %v117
    %119 = vdwg.mxu0
    %v120 = vperm.slane %v89, 2
    %125 = vrot.lane.b32.xlu0 %v85, 64
    %v126 = vpop.permute.xlu0 %125
    %127 = vrot.lane.b32.xlu0 %v86, 64
    %v128 = vpop.permute.xlu0 %127
    %129 = vrot.lane.b32.xlu0 %v87, 64
    %v130 = vpop.permute.xlu0 %129
    %131 = vrot.lane.b32.xlu0 %v88, 64
    %v132 = vpop.permute.xlu0 %131
    %v138 = vsel %vm90, %v79, 0
    %v141 = vsel %vm90, %v80, 0
    %143 = vmatpush.msra.mxu0 0.0
    %144 = vmatpush.msra.mxu0 0.0
    %145 = vmatpush.msra.mxu0 0.0
    %146 = vmatpush.msra.mxu0 0.0
    %147 = vmatpush.msra.mxu0 0.0
    %148 = vmatpush.msra.mxu0 0.0
    %149 = vmatpush.msra.mxu0 0.0
    %150 = vmatpush.msra.mxu0 0.0
    %151 = vmatpush.msra.mxu0 0.0
    %152 = vmatpush.msra.mxu0 0.0
    %153 = vmatpush.msra.mxu0 0.0
    %154 = vmatpush.msra.mxu0 0.0
    %155 = vmatpush.msra.mxu0 %v132
    %156 = vmatpush.msra.mxu0 %v130
    %157 = vmatpush.msra.mxu0 %v128
    %158 = vmatpush.msra.mxu0 %v126
    %159 = vmatmul.f32.gmra.mxu0 %v138
    %v160 = vpop.f32.mrf.mxu0
    %v161 = vadd.f32 %v120, %v160
    %162 = vmatmul.f32.gmra.mxu0 %v141
    %v163 = vpop.f32.mrf.mxu0
    %v164 = vadd.f32 %v120, %v163
    %165 = vdwg.mxu0
    %v166 = vperm.slane %v89, 0
    %v167 = vadd.f32 %v115, %v166
    %v168 = vadd.f32 %v118, %v166
    %v169 = vperm.slane %v89, 1
    %171 = vrot.lane.b32.xlu0 %v169, 32
    %v172 = vpop.permute.xlu0 %171
    %v174 = vadd.f32 %v115, %v172
    %v175 = vadd.f32 %v118, %v172
    %178 = vrot.lane.b32.xlu0 %v167, 120
    %v179 = vpop.permute.xlu0 %178
    %180 = vrot.lane.b32.xlu0 %v168, 120
    %v181 = vpop.permute.xlu0 %180
    %182 = vrot.lane.b32.xlu0 %v167, 112
    %v183 = vpop.permute.xlu0 %182
    %184 = vrot.lane.b32.xlu0 %v168, 112
    %v185 = vpop.permute.xlu0 %184
    %186 = vrot.lane.b32.xlu0 %v167, 104
    %v187 = vpop.permute.xlu0 %186
    %188 = vrot.lane.b32.xlu0 %v168, 104
    %v189 = vpop.permute.xlu0 %188
    %192 = vrot.lane.b32.xlu0 %v174, 120
    %v193 = vpop.permute.xlu0 %192
    %194 = vrot.lane.b32.xlu0 %v175, 120
    %v195 = vpop.permute.xlu0 %194
    %196 = vrot.lane.b32.xlu0 %v174, 112
    %v197 = vpop.permute.xlu0 %196
    %198 = vrot.lane.b32.xlu0 %v175, 112
    %v199 = vpop.permute.xlu0 %198
    %200 = vrot.lane.b32.xlu0 %v174, 104
    %v201 = vpop.permute.xlu0 %200
    %202 = vrot.lane.b32.xlu0 %v175, 104
    %v203 = vpop.permute.xlu0 %202
    %206 = vrot.lane.b32.xlu0 %v161, 120
    %v207 = vpop.permute.xlu0 %206
    %208 = vrot.lane.b32.xlu0 %v164, 120
    %v209 = vpop.permute.xlu0 %208
    %212 = vrot.lane.b32.xlu0 %v161, 112
    %v213 = vpop.permute.xlu0 %212
    %214 = vrot.lane.b32.xlu0 %v164, 112
    %v215 = vpop.permute.xlu0 %214
    %218 = vrot.lane.b32.xlu0 %v161, 104
    %v219 = vpop.permute.xlu0 %218
    %220 = vrot.lane.b32.xlu0 %v164, 104
    %v221 = vpop.permute.xlu0 %220
    %224 = vrot.lane.b32.xlu0 %v174, 96
    %v225 = vpop.permute.xlu0 %224
    %vm226 = vcmask 64512
    %v227 = vsel %vm226, %v167, 0
    %v229 = vsel %vm226, %v225, 0
    %231 = vmatpush.xpose.msra.mxu0 0.0
    %232 = vmatpush.xpose.msra.mxu0 0.0
    %233 = vmatpush.xpose.msra.mxu0 0.0
    %234 = vmatpush.xpose.msra.mxu0 0.0
    %235 = vmatpush.xpose.msra.mxu0 0.0
    %236 = vmatpush.xpose.msra.mxu0 0.0
    %237 = vmatpush.xpose.msra.mxu0 0.0
    %238 = vmatpush.xpose.msra.mxu0 0.0
    %239 = vmatpush.xpose.msra.mxu0 0.0
    %240 = vmatpush.xpose.msra.mxu0 0.0
    %241 = vmatpush.xpose.msra.mxu0 0.0
    %242 = vmatpush.xpose.msra.mxu0 0.0
    %243 = vmatpush.xpose.msra.mxu0 0.0
    %244 = vmatpush.xpose.msra.mxu0 0.0
    %245 = vmatpush.xpose.msra.mxu0 0.0
    %246 = vmatpush.xpose.msra.mxu0 %v229
    %247 = vmatmul.f32.gmra.mxu0 %v227
    %v248 = vpop.f32.mrf.mxu0
    %v249 = vadd.f32 0.0, %v248
    %250 = vdwg.mxu0
    %251 = vrot.lane.b32.xlu0 %v175, 96
    %v252 = vpop.permute.xlu0 %251
    %v253 = vsel %vm226, %v168, 0
    %v255 = vsel %vm226, %v252, 0
    %257 = vmatpush.xpose.msra.mxu0 0.0
    %258 = vmatpush.xpose.msra.mxu0 0.0
    %259 = vmatpush.xpose.msra.mxu0 0.0
    %260 = vmatpush.xpose.msra.mxu0 0.0
    %261 = vmatpush.xpose.msra.mxu0 0.0
    %262 = vmatpush.xpose.msra.mxu0 0.0
    %263 = vmatpush.xpose.msra.mxu0 0.0
    %264 = vmatpush.xpose.msra.mxu0 0.0
    %265 = vmatpush.xpose.msra.mxu0 0.0
    %266 = vmatpush.xpose.msra.mxu0 0.0
    %267 = vmatpush.xpose.msra.mxu0 0.0
    %268 = vmatpush.xpose.msra.mxu0 0.0
    %269 = vmatpush.xpose.msra.mxu0 0.0
    %270 = vmatpush.xpose.msra.mxu0 0.0
    %271 = vmatpush.xpose.msra.mxu0 0.0
    %272 = vmatpush.xpose.msra.mxu0 %v255
    %273 = vmatmul.f32.gmra.mxu0 %v253
    %v274 = vpop.f32.mrf.mxu0
    %v275 = vadd.f32 0.0, %v274
    %276 = vdwg.mxu0
    %277 = vrot.lane.b32.xlu0 %v193, 96
    %v278 = vpop.permute.xlu0 %277
    %v279 = vsel %vm226, %v179, 0
    %v281 = vsel %vm226, %v278, 0
    %283 = vmatpush.xpose.msra.mxu0 0.0
    %284 = vmatpush.xpose.msra.mxu0 0.0
    %285 = vmatpush.xpose.msra.mxu0 0.0
    %286 = vmatpush.xpose.msra.mxu0 0.0
    %287 = vmatpush.xpose.msra.mxu0 0.0
    %288 = vmatpush.xpose.msra.mxu0 0.0
    %289 = vmatpush.xpose.msra.mxu0 0.0
    %290 = vmatpush.xpose.msra.mxu0 0.0
    %291 = vmatpush.xpose.msra.mxu0 0.0
    %292 = vmatpush.xpose.msra.mxu0 0.0
    %293 = vmatpush.xpose.msra.mxu0 0.0
    %294 = vmatpush.xpose.msra.mxu0 0.0
    %295 = vmatpush.xpose.msra.mxu0 0.0
    %296 = vmatpush.xpose.msra.mxu0 0.0
    %297 = vmatpush.xpose.msra.mxu0 0.0
    %298 = vmatpush.xpose.msra.mxu0 %v281
    %299 = vmatmul.f32.gmra.mxu0 %v279
    %v300 = vpop.f32.mrf.mxu0
    %v301 = vadd.f32 0.0, %v300
    %302 = vdwg.mxu0
    %303 = vrot.lane.b32.xlu0 %v195, 96
    %v304 = vpop.permute.xlu0 %303
    %v305 = vsel %vm226, %v181, 0
    %v307 = vsel %vm226, %v304, 0
    %309 = vmatpush.xpose.msra.mxu0 0.0
    %310 = vmatpush.xpose.msra.mxu0 0.0
    %311 = vmatpush.xpose.msra.mxu0 0.0
    %312 = vmatpush.xpose.msra.mxu0 0.0
    %313 = vmatpush.xpose.msra.mxu0 0.0
    %314 = vmatpush.xpose.msra.mxu0 0.0
    %315 = vmatpush.xpose.msra.mxu0 0.0
    %316 = vmatpush.xpose.msra.mxu0 0.0
    %317 = vmatpush.xpose.msra.mxu0 0.0
    %318 = vmatpush.xpose.msra.mxu0 0.0
    %319 = vmatpush.xpose.msra.mxu0 0.0
    %320 = vmatpush.xpose.msra.mxu0 0.0
    %321 = vmatpush.xpose.msra.mxu0 0.0
    %322 = vmatpush.xpose.msra.mxu0 0.0
    %323 = vmatpush.xpose.msra.mxu0 0.0
    %324 = vmatpush.xpose.msra.mxu0 %v307
    %325 = vmatmul.f32.gmra.mxu0 %v305
    %v326 = vpop.f32.mrf.mxu0
    %v327 = vadd.f32 0.0, %v326
    %328 = vdwg.mxu0
    %329 = vrot.lane.b32.xlu0 %v197, 96
    %v330 = vpop.permute.xlu0 %329
    %v331 = vsel %vm226, %v183, 0
    %v333 = vsel %vm226, %v330, 0
    %335 = vmatpush.xpose.msra.mxu0 0.0
    %336 = vmatpush.xpose.msra.mxu0 0.0
    %337 = vmatpush.xpose.msra.mxu0 0.0
    %338 = vmatpush.xpose.msra.mxu0 0.0
    %339 = vmatpush.xpose.msra.mxu0 0.0
    %340 = vmatpush.xpose.msra.mxu0 0.0
    %341 = vmatpush.xpose.msra.mxu0 0.0
    %342 = vmatpush.xpose.msra.mxu0 0.0
    %343 = vmatpush.xpose.msra.mxu0 0.0
    %344 = vmatpush.xpose.msra.mxu0 0.0
    %345 = vmatpush.xpose.msra.mxu0 0.0
    %346 = vmatpush.xpose.msra.mxu0 0.0
    %347 = vmatpush.xpose.msra.mxu0 0.0
    %348 = vmatpush.xpose.msra.mxu0 0.0
    %349 = vmatpush.xpose.msra.mxu0 0.0
    %350 = vmatpush.xpose.msra.mxu0 %v333
    %351 = vmatmul.f32.gmra.mxu0 %v331
    %v352 = vpop.f32.mrf.mxu0
    %v353 = vadd.f32 0.0, %v352
    %354 = vdwg.mxu0
    %355 = vrot.lane.b32.xlu0 %v199, 96
    %v356 = vpop.permute.xlu0 %355
    %v357 = vsel %vm226, %v185, 0
    %v359 = vsel %vm226, %v356, 0
    %361 = vmatpush.xpose.msra.mxu0 0.0
    %362 = vmatpush.xpose.msra.mxu0 0.0
    %363 = vmatpush.xpose.msra.mxu0 0.0
    %364 = vmatpush.xpose.msra.mxu0 0.0
    %365 = vmatpush.xpose.msra.mxu0 0.0
    %366 = vmatpush.xpose.msra.mxu0 0.0
    %367 = vmatpush.xpose.msra.mxu0 0.0
    %368 = vmatpush.xpose.msra.mxu0 0.0
    %369 = vmatpush.xpose.msra.mxu0 0.0
    %370 = vmatpush.xpose.msra.mxu0 0.0
    %371 = vmatpush.xpose.msra.mxu0 0.0
    %372 = vmatpush.xpose.msra.mxu0 0.0
    %373 = vmatpush.xpose.msra.mxu0 0.0
    %374 = vmatpush.xpose.msra.mxu0 0.0
    %375 = vmatpush.xpose.msra.mxu0 0.0
    %376 = vmatpush.xpose.msra.mxu0 %v359
    %377 = vmatmul.f32.gmra.mxu0 %v357
    %v378 = vpop.f32.mrf.mxu0
    %v379 = vadd.f32 0.0, %v378
    %380 = vdwg.mxu0
    %381 = vrot.lane.b32.xlu0 %v201, 96
    %v382 = vpop.permute.xlu0 %381
    %v383 = vsel %vm226, %v187, 0
    %v385 = vsel %vm226, %v382, 0
    %387 = vmatpush.xpose.msra.mxu0 0.0
    %388 = vmatpush.xpose.msra.mxu0 0.0
    %389 = vmatpush.xpose.msra.mxu0 0.0
    %390 = vmatpush.xpose.msra.mxu0 0.0
    %391 = vmatpush.xpose.msra.mxu0 0.0
    %392 = vmatpush.xpose.msra.mxu0 0.0
    %393 = vmatpush.xpose.msra.mxu0 0.0
    %394 = vmatpush.xpose.msra.mxu0 0.0
    %395 = vmatpush.xpose.msra.mxu0 0.0
    %396 = vmatpush.xpose.msra.mxu0 0.0
    %397 = vmatpush.xpose.msra.mxu0 0.0
    %398 = vmatpush.xpose.msra.mxu0 0.0
    %399 = vmatpush.xpose.msra.mxu0 0.0
    %400 = vmatpush.xpose.msra.mxu0 0.0
    %401 = vmatpush.xpose.msra.mxu0 0.0
    %402 = vmatpush.xpose.msra.mxu0 %v385
    %403 = vmatmul.f32.gmra.mxu0 %v383
    %v404 = vpop.f32.mrf.mxu0
    %v405 = vadd.f32 0.0, %v404
    %406 = vdwg.mxu0
    %407 = vrot.lane.b32.xlu0 %v203, 96
    %v408 = vpop.permute.xlu0 %407
    %v409 = vsel %vm226, %v189, 0
    %v411 = vsel %vm226, %v408, 0
    %413 = vmatpush.xpose.msra.mxu0 0.0
    %414 = vmatpush.xpose.msra.mxu0 0.0
    %415 = vmatpush.xpose.msra.mxu0 0.0
    %416 = vmatpush.xpose.msra.mxu0 0.0
    %417 = vmatpush.xpose.msra.mxu0 0.0
    %418 = vmatpush.xpose.msra.mxu0 0.0
    %419 = vmatpush.xpose.msra.mxu0 0.0
    %420 = vmatpush.xpose.msra.mxu0 0.0
    %421 = vmatpush.xpose.msra.mxu0 0.0
    %422 = vmatpush.xpose.msra.mxu0 0.0
    %423 = vmatpush.xpose.msra.mxu0 0.0
    %424 = vmatpush.xpose.msra.mxu0 0.0
    %425 = vmatpush.xpose.msra.mxu0 0.0
    %426 = vmatpush.xpose.msra.mxu0 0.0
    %427 = vmatpush.xpose.msra.mxu0 0.0
    %428 = vmatpush.xpose.msra.mxu0 %v411
    %429 = vmatmul.f32.gmra.mxu0 %v409
    %v430 = vpop.f32.mrf.mxu0
    %v431 = vadd.f32 0.0, %v430
    %432 = vdwg.mxu0
    %v433 = vsel %vm226, %v249, -inf
    %434 = vmax.xlane.f32.xlu0 %v433
    %v435 = vpop.xlane.xlu0 %434
    %v436 = vsel %vm226, %v275, -inf
    %437 = vmax.xlane.f32.xlu0 %v436
    %v438 = vpop.xlane.xlu0 %437
    %v439 = vsel %vm226, %v301, -inf
    %440 = vmax.xlane.f32.xlu0 %v439
    %v441 = vpop.xlane.xlu0 %440
    %v442 = vsel %vm226, %v327, -inf
    %443 = vmax.xlane.f32.xlu0 %v442
    %v444 = vpop.xlane.xlu0 %443
    %v445 = vsel %vm226, %v353, -inf
    %446 = vmax.xlane.f32.xlu0 %v445
    %v447 = vpop.xlane.xlu0 %446
    %v448 = vsel %vm226, %v379, -inf
    %449 = vmax.xlane.f32.xlu0 %v448
    %v450 = vpop.xlane.xlu0 %449
    %v451 = vsel %vm226, %v405, -inf
    %452 = vmax.xlane.f32.xlu0 %v451
    %v453 = vpop.xlane.xlu0 %452
    %v454 = vsel %vm226, %v431, -inf
    %455 = vmax.xlane.f32.xlu0 %v454
    %v456 = vpop.xlane.xlu0 %455
    %v457 = vsub.f32 %v249, %v435
    %v458 = vsub.f32 %v275, %v438
    %v459 = vsub.f32 %v301, %v441
    %v460 = vsub.f32 %v327, %v444
    %v461 = vsub.f32 %v353, %v447
    %v462 = vsub.f32 %v379, %v450
    %v463 = vsub.f32 %v405, %v453
    %v464 = vsub.f32 %v431, %v456
    %v465 = vmul.f32 %v457, 1.442695
    %v466 = vpow.pop %v465
    %v467 = vmul.f32 %v458, 1.442695
    %v468 = vpow.pop %v467
    %v469 = vmul.f32 %v459, 1.442695
    %v470 = vpow.pop %v469
    %v471 = vmul.f32 %v460, 1.442695
    %v472 = vpow.pop %v471
    %v473 = vmul.f32 %v461, 1.442695
    %v474 = vpow.pop %v473
    %v475 = vmul.f32 %v462, 1.442695
    %v476 = vpow.pop %v475
    %v477 = vmul.f32 %v463, 1.442695
    %v478 = vpow.pop %v477
    %v479 = vmul.f32 %v464, 1.442695
    %v480 = vpow.pop %v479
    %v481 = vsel %vm226, %v466, 0.0
    %482 = vadd.xlane.f32.xlu0 %v481
    %v483 = vpop.xlane.xlu0 %482
    %v484 = vsel %vm226, %v468, 0.0
    %485 = vadd.xlane.f32.xlu0 %v484
    %v486 = vpop.xlane.xlu0 %485
    %v487 = vsel %vm226, %v470, 0.0
    %488 = vadd.xlane.f32.xlu0 %v487
    %v489 = vpop.xlane.xlu0 %488
    %v490 = vsel %vm226, %v472, 0.0
    %491 = vadd.xlane.f32.xlu0 %v490
    %v492 = vpop.xlane.xlu0 %491
    %v493 = vsel %vm226, %v474, 0.0
    %494 = vadd.xlane.f32.xlu0 %v493
    %v495 = vpop.xlane.xlu0 %494
    %v496 = vsel %vm226, %v476, 0.0
    %497 = vadd.xlane.f32.xlu0 %v496
    %v498 = vpop.xlane.xlu0 %497
    %v499 = vsel %vm226, %v478, 0.0
    %500 = vadd.xlane.f32.xlu0 %v499
    %v501 = vpop.xlane.xlu0 %500
    %v502 = vsel %vm226, %v480, 0.0
    %503 = vadd.xlane.f32.xlu0 %v502
    %v504 = vpop.xlane.xlu0 %503
    %v505 = vrcp.pop %v483
    %v506 = vmul.f32 %v483, %v505
    %v507 = vsub.f32 1.0, %v506
    %v508 = vmul.f32 %v505, %v507
    %v509 = vadd.f32 %v505, %v508
    %vm510 = vweird.f32 %v483
    %vm511 = vweird.f32 %v505
    %vm512 = vmor %vm510, %vm511
    %v513 = vsel %vm512, %v505, %v509
    %v514 = vand.u32 2147483647, %v483
    %vm515 = vcmp.eq.f32.partialorder %v514, 8.507059e+37
    %v516 = vand.u32 %v483, 2147483648
    %v517 = vor.u32 1.1754944e-38, %v516
    %v518 = vsel %vm515, %v517, %v513
    %v519 = vmul.f32 %v466, %v518
    %v520 = vrcp.pop %v486
    %v521 = vmul.f32 %v486, %v520
    %v522 = vsub.f32 1.0, %v521
    %v523 = vmul.f32 %v520, %v522
    %v524 = vadd.f32 %v520, %v523
    %vm525 = vweird.f32 %v486
    %vm526 = vweird.f32 %v520
    %vm527 = vmor %vm525, %vm526
    %v528 = vsel %vm527, %v520, %v524
    %v529 = vand.u32 2147483647, %v486
    %vm530 = vcmp.eq.f32.partialorder %v529, 8.507059e+37
    %v531 = vand.u32 %v486, 2147483648
    %v532 = vor.u32 1.1754944e-38, %v531
    %v533 = vsel %vm530, %v532, %v528
    %v534 = vmul.f32 %v468, %v533
    %v535 = vrcp.pop %v489
    %v536 = vmul.f32 %v489, %v535
    %v537 = vsub.f32 1.0, %v536
    %v538 = vmul.f32 %v535, %v537
    %v539 = vadd.f32 %v535, %v538
    %vm540 = vweird.f32 %v489
    %vm541 = vweird.f32 %v535
    %vm542 = vmor %vm540, %vm541
    %v543 = vsel %vm542, %v535, %v539
    %v544 = vand.u32 2147483647, %v489
    %vm545 = vcmp.eq.f32.partialorder %v544, 8.507059e+37
    %v546 = vand.u32 %v489, 2147483648
    %v547 = vor.u32 1.1754944e-38, %v546
    %v548 = vsel %vm545, %v547, %v543
    %v549 = vmul.f32 %v470, %v548
    %v550 = vrcp.pop %v492
    %v551 = vmul.f32 %v492, %v550
    %v552 = vsub.f32 1.0, %v551
    %v553 = vmul.f32 %v550, %v552
    %v554 = vadd.f32 %v550, %v553
    %vm555 = vweird.f32 %v492
    %vm556 = vweird.f32 %v550
    %vm557 = vmor %vm555, %vm556
    %v558 = vsel %vm557, %v550, %v554
    %v559 = vand.u32 2147483647, %v492
    %vm560 = vcmp.eq.f32.partialorder %v559, 8.507059e+37
    %v561 = vand.u32 %v492, 2147483648
    %v562 = vor.u32 1.1754944e-38, %v561
    %v563 = vsel %vm560, %v562, %v558
    %v564 = vmul.f32 %v472, %v563
    %v565 = vrcp.pop %v495
    %v566 = vmul.f32 %v495, %v565
    %v567 = vsub.f32 1.0, %v566
    %v568 = vmul.f32 %v565, %v567
    %v569 = vadd.f32 %v565, %v568
    %vm570 = vweird.f32 %v495
    %vm571 = vweird.f32 %v565
    %vm572 = vmor %vm570, %vm571
    %v573 = vsel %vm572, %v565, %v569
    %v574 = vand.u32 2147483647, %v495
    %vm575 = vcmp.eq.f32.partialorder %v574, 8.507059e+37
    %v576 = vand.u32 %v495, 2147483648
    %v577 = vor.u32 1.1754944e-38, %v576
    %v578 = vsel %vm575, %v577, %v573
    %v579 = vmul.f32 %v474, %v578
    %v580 = vrcp.pop %v498
    %v581 = vmul.f32 %v498, %v580
    %v582 = vsub.f32 1.0, %v581
    %v583 = vmul.f32 %v580, %v582
    %v584 = vadd.f32 %v580, %v583
    %vm585 = vweird.f32 %v498
    %vm586 = vweird.f32 %v580
    %vm587 = vmor %vm585, %vm586
    %v588 = vsel %vm587, %v580, %v584
    %v589 = vand.u32 2147483647, %v498
    %vm590 = vcmp.eq.f32.partialorder %v589, 8.507059e+37
    %v591 = vand.u32 %v498, 2147483648
    %v592 = vor.u32 1.1754944e-38, %v591
    %v593 = vsel %vm590, %v592, %v588
    %v594 = vmul.f32 %v476, %v593
    %v595 = vrcp.pop %v501
    %v596 = vmul.f32 %v501, %v595
    %v597 = vsub.f32 1.0, %v596
    %v598 = vmul.f32 %v595, %v597
    %v599 = vadd.f32 %v595, %v598
    %vm600 = vweird.f32 %v501
    %vm601 = vweird.f32 %v595
    %vm602 = vmor %vm600, %vm601
    %v603 = vsel %vm602, %v595, %v599
    %v604 = vand.u32 2147483647, %v501
    %vm605 = vcmp.eq.f32.partialorder %v604, 8.507059e+37
    %v606 = vand.u32 %v501, 2147483648
    %v607 = vor.u32 1.1754944e-38, %v606
    %v608 = vsel %vm605, %v607, %v603
    %v609 = vmul.f32 %v478, %v608
    %v610 = vrcp.pop %v504
    %v611 = vmul.f32 %v504, %v610
    %v612 = vsub.f32 1.0, %v611
    %v613 = vmul.f32 %v610, %v612
    %v614 = vadd.f32 %v610, %v613
    %vm615 = vweird.f32 %v504
    %vm616 = vweird.f32 %v610
    %vm617 = vmor %vm615, %vm616
    %v618 = vsel %vm617, %v610, %v614
    %v619 = vand.u32 2147483647, %v504
    %vm620 = vcmp.eq.f32.partialorder %v619, 8.507059e+37
    %v621 = vand.u32 %v504, 2147483648
    %v622 = vor.u32 1.1754944e-38, %v621
    %v623 = vsel %vm620, %v622, %v618
    %v624 = vmul.f32 %v480, %v623
    %v626 = vsel %vm226, %v519, 0
    %628 = vmatpush.msra.mxu0 0.0
    %629 = vmatpush.msra.mxu0 0.0
    %630 = vmatpush.msra.mxu0 0.0
    %631 = vmatpush.msra.mxu0 0.0
    %632 = vmatpush.msra.mxu0 0.0
    %633 = vmatpush.msra.mxu0 0.0
    %634 = vmatpush.msra.mxu0 0.0
    %635 = vmatpush.msra.mxu0 0.0
    %636 = vmatpush.msra.mxu0 0.0
    %637 = vmatpush.msra.mxu0 0.0
    %638 = vmatpush.msra.mxu0 0.0
    %639 = vmatpush.msra.mxu0 0.0
    %640 = vmatpush.msra.mxu0 0.0
    %641 = vmatpush.msra.mxu0 0.0
    %642 = vmatpush.msra.mxu0 0.0
    %643 = vmatpush.msra.mxu0 %v161
    %644 = vmatmul.f32.gmra.mxu0 %v626
    %v645 = vpop.f32.mrf.mxu0
    %v646 = vadd.f32 0.0, %v645
    %647 = vdwg.mxu0
    %v649 = vsel %vm226, %v534, 0
    %651 = vmatpush.msra.mxu0 0.0
    %652 = vmatpush.msra.mxu0 0.0
    %653 = vmatpush.msra.mxu0 0.0
    %654 = vmatpush.msra.mxu0 0.0
    %655 = vmatpush.msra.mxu0 0.0
    %656 = vmatpush.msra.mxu0 0.0
    %657 = vmatpush.msra.mxu0 0.0
    %658 = vmatpush.msra.mxu0 0.0
    %659 = vmatpush.msra.mxu0 0.0
    %660 = vmatpush.msra.mxu0 0.0
    %661 = vmatpush.msra.mxu0 0.0
    %662 = vmatpush.msra.mxu0 0.0
    %663 = vmatpush.msra.mxu0 0.0
    %664 = vmatpush.msra.mxu0 0.0
    %665 = vmatpush.msra.mxu0 0.0
    %666 = vmatpush.msra.mxu0 %v164
    %667 = vmatmul.f32.gmra.mxu0 %v649
    %v668 = vpop.f32.mrf.mxu0
    %v669 = vadd.f32 0.0, %v668
    %670 = vdwg.mxu0
    %v672 = vsel %vm226, %v549, 0
    %674 = vmatpush.msra.mxu0 0.0
    %675 = vmatpush.msra.mxu0 0.0
    %676 = vmatpush.msra.mxu0 0.0
    %677 = vmatpush.msra.mxu0 0.0
    %678 = vmatpush.msra.mxu0 0.0
    %679 = vmatpush.msra.mxu0 0.0
    %680 = vmatpush.msra.mxu0 0.0
    %681 = vmatpush.msra.mxu0 0.0
    %682 = vmatpush.msra.mxu0 0.0
    %683 = vmatpush.msra.mxu0 0.0
    %684 = vmatpush.msra.mxu0 0.0
    %685 = vmatpush.msra.mxu0 0.0
    %686 = vmatpush.msra.mxu0 0.0
    %687 = vmatpush.msra.mxu0 0.0
    %688 = vmatpush.msra.mxu0 0.0
    %689 = vmatpush.msra.mxu0 %v207
    %690 = vmatmul.f32.gmra.mxu0 %v672
    %v691 = vpop.f32.mrf.mxu0
    %v692 = vadd.f32 0.0, %v691
    %693 = vdwg.mxu0
    %v695 = vsel %vm226, %v564, 0
    %697 = vmatpush.msra.mxu0 0.0
    %698 = vmatpush.msra.mxu0 0.0
    %699 = vmatpush.msra.mxu0 0.0
    %700 = vmatpush.msra.mxu0 0.0
    %701 = vmatpush.msra.mxu0 0.0
    %702 = vmatpush.msra.mxu0 0.0
    %703 = vmatpush.msra.mxu0 0.0
    %704 = vmatpush.msra.mxu0 0.0
    %705 = vmatpush.msra.mxu0 0.0
    %706 = vmatpush.msra.mxu0 0.0
    %707 = vmatpush.msra.mxu0 0.0
    %708 = vmatpush.msra.mxu0 0.0
    %709 = vmatpush.msra.mxu0 0.0
    %710 = vmatpush.msra.mxu0 0.0
    %711 = vmatpush.msra.mxu0 0.0
    %712 = vmatpush.msra.mxu0 %v209
    %713 = vmatmul.f32.gmra.mxu0 %v695
    %v714 = vpop.f32.mrf.mxu0
    %v715 = vadd.f32 0.0, %v714
    %716 = vdwg.mxu0
    %v718 = vsel %vm226, %v579, 0
    %720 = vmatpush.msra.mxu0 0.0
    %721 = vmatpush.msra.mxu0 0.0
    %722 = vmatpush.msra.mxu0 0.0
    %723 = vmatpush.msra.mxu0 0.0
    %724 = vmatpush.msra.mxu0 0.0
    %725 = vmatpush.msra.mxu0 0.0
    %726 = vmatpush.msra.mxu0 0.0
    %727 = vmatpush.msra.mxu0 0.0
    %728 = vmatpush.msra.mxu0 0.0
    %729 = vmatpush.msra.mxu0 0.0
    %730 = vmatpush.msra.mxu0 0.0
    %731 = vmatpush.msra.mxu0 0.0
    %732 = vmatpush.msra.mxu0 0.0
    %733 = vmatpush.msra.mxu0 0.0
    %734 = vmatpush.msra.mxu0 0.0
    %735 = vmatpush.msra.mxu0 %v213
    %736 = vmatmul.f32.gmra.mxu0 %v718
    %v737 = vpop.f32.mrf.mxu0
    %v738 = vadd.f32 0.0, %v737
    %739 = vdwg.mxu0
    %v741 = vsel %vm226, %v594, 0
    %743 = vmatpush.msra.mxu0 0.0
    %744 = vmatpush.msra.mxu0 0.0
    %745 = vmatpush.msra.mxu0 0.0
    %746 = vmatpush.msra.mxu0 0.0
    %747 = vmatpush.msra.mxu0 0.0
    %748 = vmatpush.msra.mxu0 0.0
    %749 = vmatpush.msra.mxu0 0.0
    %750 = vmatpush.msra.mxu0 0.0
    %751 = vmatpush.msra.mxu0 0.0
    %752 = vmatpush.msra.mxu0 0.0
    %753 = vmatpush.msra.mxu0 0.0
    %754 = vmatpush.msra.mxu0 0.0
    %755 = vmatpush.msra.mxu0 0.0
    %756 = vmatpush.msra.mxu0 0.0
    %757 = vmatpush.msra.mxu0 0.0
    %758 = vmatpush.msra.mxu0 %v215
    %759 = vmatmul.f32.gmra.mxu0 %v741
    %v760 = vpop.f32.mrf.mxu0
    %v761 = vadd.f32 0.0, %v760
    %762 = vdwg.mxu0
    %v764 = vsel %vm226, %v609, 0
    %766 = vmatpush.msra.mxu0 0.0
    %767 = vmatpush.msra.mxu0 0.0
    %768 = vmatpush.msra.mxu0 0.0
    %769 = vmatpush.msra.mxu0 0.0
    %770 = vmatpush.msra.mxu0 0.0
    %771 = vmatpush.msra.mxu0 0.0
    %772 = vmatpush.msra.mxu0 0.0
    %773 = vmatpush.msra.mxu0 0.0
    %774 = vmatpush.msra.mxu0 0.0
    %775 = vmatpush.msra.mxu0 0.0
    %776 = vmatpush.msra.mxu0 0.0
    %777 = vmatpush.msra.mxu0 0.0
    %778 = vmatpush.msra.mxu0 0.0
    %779 = vmatpush.msra.mxu0 0.0
    %780 = vmatpush.msra.mxu0 0.0
    %781 = vmatpush.msra.mxu0 %v219
    %782 = vmatmul.f32.gmra.mxu0 %v764
    %v783 = vpop.f32.mrf.mxu0
    %v784 = vadd.f32 0.0, %v783
    %785 = vdwg.mxu0
    %v787 = vsel %vm226, %v624, 0
    %789 = vmatpush.msra.mxu0 0.0
    %790 = vmatpush.msra.mxu0 0.0
    %791 = vmatpush.msra.mxu0 0.0
    %792 = vmatpush.msra.mxu0 0.0
    %793 = vmatpush.msra.mxu0 0.0
    %794 = vmatpush.msra.mxu0 0.0
    %795 = vmatpush.msra.mxu0 0.0
    %796 = vmatpush.msra.mxu0 0.0
    %797 = vmatpush.msra.mxu0 0.0
    %798 = vmatpush.msra.mxu0 0.0
    %799 = vmatpush.msra.mxu0 0.0
    %800 = vmatpush.msra.mxu0 0.0
    %801 = vmatpush.msra.mxu0 0.0
    %802 = vmatpush.msra.mxu0 0.0
    %803 = vmatpush.msra.mxu0 0.0
    %804 = vmatpush.msra.mxu0 %v221
    %805 = vmatmul.f32.gmra.mxu0 %v787
    %v806 = vpop.f32.mrf.mxu0
    %v807 = vadd.f32 0.0, %v806
    %808 = vdwg.mxu0
    %811 = vrot.lane.b32.xlu0 %v692, 8
    %v812 = vpop.permute.xlu0 %811
    %813 = vrot.lane.b32.xlu0 %v715, 8
    %v814 = vpop.permute.xlu0 %813
    %819 = vrot.lane.b32.xlu0 %v738, 16
    %v820 = vpop.permute.xlu0 %819
    %821 = vrot.lane.b32.xlu0 %v761, 16
    %v822 = vpop.permute.xlu0 %821
    %827 = vrot.lane.b32.xlu0 %v784, 24
    %v828 = vpop.permute.xlu0 %827
    %829 = vrot.lane.b32.xlu0 %v807, 24
    %v830 = vpop.permute.xlu0 %829
    %v833 = vsel %vm226, %v646, %v812
    %v834 = vsel %vm226, %v669, %v814
    %vm835 = vcmask 130048
    %v836 = vsel %vm835, %v833, %v820
    %v837 = vsel %vm835, %v834, %v822
    %vm838 = vcmask 195584
    %v839 = vsel %vm838, %v836, %v828
    %v840 = vsel %vm838, %v837, %v830
    %v841 = vperm.slane %v89, 3
    %842 = vrot.lane.b32.xlu0 %v85, 32
    %v843 = vpop.permute.xlu0 %842
    %844 = vrot.lane.b32.xlu0 %v86, 32
    %v845 = vpop.permute.xlu0 %844
    %846 = vrot.lane.b32.xlu0 %v87, 32
    %v847 = vpop.permute.xlu0 %846
    %848 = vrot.lane.b32.xlu0 %v88, 32
    %v849 = vpop.permute.xlu0 %848
    %v855 = vsel %vm90, %v839, 0
    %v858 = vsel %vm90, %v840, 0
    %860 = vmatpush.msra.mxu0 0.0
    %861 = vmatpush.msra.mxu0 0.0
    %862 = vmatpush.msra.mxu0 0.0
    %863 = vmatpush.msra.mxu0 0.0
    %864 = vmatpush.msra.mxu0 0.0
    %865 = vmatpush.msra.mxu0 0.0
    %866 = vmatpush.msra.mxu0 0.0
    %867 = vmatpush.msra.mxu0 0.0
    %868 = vmatpush.msra.mxu0 0.0
    %869 = vmatpush.msra.mxu0 0.0
    %870 = vmatpush.msra.mxu0 0.0
    %871 = vmatpush.msra.mxu0 0.0
    %872 = vmatpush.msra.mxu0 %v849
    %873 = vmatpush.msra.mxu0 %v847
    %874 = vmatpush.msra.mxu0 %v845
    %875 = vmatpush.msra.mxu0 %v843
    %876 = vmatmul.f32.gmra.mxu0 %v855
    %v877 = vpop.f32.mrf.mxu0
    %v878 = vadd.f32 %v841, %v877
    %879 = vmatmul.f32.gmra.mxu0 %v858
    %v880 = vpop.f32.mrf.mxu0
    %v881 = vadd.f32 %v841, %v880
    %882 = vdwg.mxu0
    %v883 = vadd.f32 %v79, %v878
    %v884 = vadd.f32 %v80, %v881
    %v885 = vsel %vm90, %v883, 0.0
    %886 = vadd.xlane.f32.xlu0 %v885
    %v887 = vpop.xlane.xlu0 %886
    %v888 = vsel %vm90, %v884, 0.0
    %889 = vadd.xlane.f32.xlu0 %v888
    %v890 = vpop.xlane.xlu0 %889
    %v891 = vrcp.pop 32.0
    %v892 = vmul.f32 32.0, %v891
    %v893 = vsub.f32 1.0, %v892
    %v894 = vmul.f32 %v891, %v893
    %v895 = vadd.f32 %v891, %v894
    %vm896 = vweird.f32 %v891
    %v897 = vsel %vm896, %v891, %v895
    %v898 = vmul.f32 %v887, %v897
    %v899 = vmul.f32 %v890, %v897
    %v900 = vsub.f32 %v883, %v898
    %v901 = vsub.f32 %v884, %v899
    %v902 = vmul.f32 %v900, %v900
    %v903 = vmul.f32 %v901, %v901
    %v904 = vsel %vm90, %v902, 0.0
    %905 = vadd.xlane.f32.xlu0 %v904
    %v906 = vpop.xlane.xlu0 %905
    %v907 = vsel %vm90, %v903, 0.0
    %908 = vadd.xlane.f32.xlu0 %v907
    %v909 = vpop.xlane.xlu0 %908
    %v910 = vmul.f32 %v906, %v897
    %v911 = vmul.f32 %v909, %v897
    %v912 = vadd.f32 %v910, 1e-05
    %v913 = vadd.f32 %v911, 1e-05
    %v914 = vrsqrt.pop %v912
    %v915 = vmul.f32 %v914, %v912
    %v916 = vmul.f32 %v915, %v914
    %v917 = vmul.f32 0.5, %v916
    %v918 = vsub.f32 1.5, %v917
    %v919 = vmul.f32 %v914, %v918
    %vm920 = vweird.f32 %v912
    %vm921 = vweird.f32 %v914
    %vm922 = vmor %vm920, %vm921
    %v923 = vsel %vm922, %v914, %v919
    %v924 = vrsqrt.pop %v913
    %v925 = vmul.f32 %v924, %v913
    %v926 = vmul.f32 %v925, %v924
    %v927 = vmul.f32 0.5, %v926
    %v928 = vsub.f32 1.5, %v927
    %v929 = vmul.f32 %v924, %v928
    %vm930 = vweird.f32 %v913
    %vm931 = vweird.f32 %v924
    %vm932 = vmor %vm930, %vm931
    %v933 = vsel %vm932, %v924, %v929
    %v934 = vmul.f32 %v900, %v923
    %v935 = vmul.f32 %v901, %v933
    %v936 = vperm.slane %v89, 4
    %v937 = vmul.f32 %v934, %v936
    %v938 = vmul.f32 %v935, %v936
    %v939 = vperm.slane %v89, 5
    %v940 = vadd.f32 %v937, %v939
    %v941 = vadd.f32 %v938, %v939
    %942 = vst.msk [vmem:[#allocation10] sm:$0xff] %vm90, %v940
    %943 = vst.msk [vmem:[#allocation10 + $0x8] sm:$0xff] %vm90, %v941
    // Predicated region
    $region34: #{tpu_custom_call.1} parent=1 // pred_check
      _
    $region35: #{tpu_custom_call.1} parent=1 // pred_check_branch
      %945 = sbr.rel (0) target = $region37
    $region36: #{tpu_custom_call.1} parent=1 // pred_region
      %947 = vsyncadd [#allocation4], 0
      %s948 = sshll.u32 [#allocation10], 4
      %s949 = int_to_ptr.vmem [resolvable:$true] %s948
      %s950 = sshll.u32 %s4, 4
      %s951 = int_to_ptr.hbm [resolvable:$true] %s950
      %956 = dma.vmem_to_hbm [thread:$0]  %s949, 256, %s951, [#allocation4], 128, 128, 8
    $region37: #{tpu_custom_call.1} parent=1 // pred_fallthru
      _
    // Predicated region
    $region38: #{tpu_custom_call.1} parent=1 // pred_check
      _
    $region39: #{tpu_custom_call.1} parent=1 // pred_check_branch
      %958 = sbr.rel (0) target = $region41
    $region40: #{tpu_custom_call.1} parent=1 // pred_region
      %960 = dma.done [#allocation4], 256
    $region41: #{tpu_custom_call.1} parent=1 // pred_fallthru
      _
    %961 = vsyncpa [#allocation3], 1
    %962 = vsyncpa [#allocation6], 1
    %963 = vsyncpa [#allocation9], 1
    %964 = vsyncpa [#allocation4], 1

</llo_original>
